<compile_context>
chip_gen: v7x
topology: tpu7x:2x2x1
jax: 0.10.0
libtpu: 0.0.40
codegen_flags: <defaults>
</compile_context>

<pallas_src>
import functools

import jax
import jax.numpy as jnp
from jax.experimental import pallas as pl
from jax.experimental.pallas import tpu as pltpu


def _round_up(x, m):
    return ((x + m - 1) // m) * m


# ----------------------------------------------------------------------------
# Fused kernel: one (modality, batch-tile) point of
#   z = x @ W + b                               (accumulated over D tiles, bf16 MXU)
#   dist2 = ||z||^2 + ||mu||^2 - 2 z mu^T       (MXU, mu pre-transposed)
#   q = 1 / (1 + dist2 / alpha); q = q ** (alpha+1); q /= sum_k q
# ----------------------------------------------------------------------------
def _fused_encode_assign_kernel(x_ref, w_ref, b_ref, mut_ref, musq_ref,
                                z_ref, q_ref, *, alpha, n_clusters):
    k = pl.program_id(2)

    @pl.when(k == 0)
    def _():
        # z output block is resident across the reduction axis -> use it as
        # the f32 accumulator (no extra VMEM scratch).
        z_ref[...] = jnp.zeros_like(z_ref)

    # Encoder matmul, accumulated over the D (reduction) grid axis on the MXU.
    # bf16 inputs, f32 accumulation.
    z_ref[...] += jnp.dot(x_ref[...], w_ref[...],
                          preferred_element_type=jnp.float32)

    @pl.when(k == pl.num_programs(2) - 1)
    def _():
        z = z_ref[...] + b_ref[...]                          # (tb, Zp) f32
        z_ref[...] = z

        # dist2 via the MXU expansion; mu already transposed to (Zp, Kp).
        z_sq = jnp.sum(z * z, axis=1, keepdims=True)         # (tb, 1)
        cross = jnp.dot(z.astype(jnp.bfloat16), mut_ref[...],
                        preferred_element_type=jnp.float32)  # (tb, Kp)
        dist2 = jnp.maximum(z_sq + musq_ref[...] - 2.0 * cross, 0.0)

        # Student-t kernel.  1/alpha is a compile-time constant multiply;
        # approx reciprocal goes to the (otherwise idle) EUP vrcp slot.
        q = pl.reciprocal(1.0 + dist2 * (1.0 / alpha), approx=True)
        if alpha == 1.0:
            q = q * q                                        # pow -> one VPU mul
        else:
            q = q ** (alpha + 1.0)
        # (original "/ 2.0" cancels in the row normalization below)

        # Zero padded clusters so they do not pollute the normalization.
        col = jax.lax.broadcasted_iota(jnp.int32, q.shape, 1)
        q = jnp.where(col < n_clusters, q, 0.0)
        # Exact reciprocal here so sum_k q == 1 to ~1e-6.
        q = q * pl.reciprocal(jnp.sum(q, axis=1, keepdims=True))
        q_ref[...] = q


# ----------------------------------------------------------------------------
# One-time parameter preparation (hoisted out of the forward pass):
# pad to lane-friendly shapes, pre-transpose mu, cast MXU operands to bf16.
# ----------------------------------------------------------------------------
def prepare_multidec_params(params):
    img_w, txt_w = params["img_w"], params["txt_w"]
    img_b, txt_b = params["img_b"], params["txt_b"]
    img_mu, txt_mu = params["img_mu"], params["txt_mu"]

    D_img, Z = img_w.shape
    D_txt, Z2 = txt_w.shape
    K, Zmu = img_mu.shape
    assert Z == Z2 == Zmu and txt_mu.shape == (K, Z)

    # D padded only to a multiple of 128 (decoupled from tk); common Dp so the
    # two modalities share one grid.
    Dp = _round_up(max(D_img, D_txt), 128)
    Zp = _round_up(Z, 128)
    Kp = _round_up(K, 128)

    def pad2(a, rows, cols):
        a = jnp.asarray(a, jnp.float32)
        return jnp.pad(a, ((0, rows - a.shape[0]), (0, cols - a.shape[1])))

    w = jnp.stack([pad2(img_w, Dp, Zp),
                   pad2(txt_w, Dp, Zp)]).astype(jnp.bfloat16)        # (2, Dp, Zp)
    b = jnp.stack([pad2(jnp.reshape(img_b, (1, Z)), 1, Zp),
                   pad2(jnp.reshape(txt_b, (1, Z)), 1, Zp)])         # (2, 1, Zp) f32
    mu_f32 = jnp.stack([pad2(img_mu, Kp, Zp),
                        pad2(txt_mu, Kp, Zp)])                       # (2, Kp, Zp)
    musq = jnp.transpose(jnp.sum(mu_f32 * mu_f32, axis=2, keepdims=True),
                         (0, 2, 1))                                  # (2, 1, Kp) f32
    mu_t = jnp.transpose(mu_f32, (0, 2, 1)).astype(jnp.bfloat16)     # (2, Zp, Kp)

    return {
        "w": w, "b": b, "mu_t": mu_t, "musq": musq,
        "dims": dict(D_img=D_img, D_txt=D_txt, Z=Z, K=K, Dp=Dp, Zp=Zp, Kp=Kp),
    }


# ----------------------------------------------------------------------------
# Fused forward + soft assignment for both modalities (single pallas_call).
# ----------------------------------------------------------------------------
def multidec_forward_soft_assign(image_x, text_x, prepared, *, alpha=1.0,
                                 tb_pref=128, tk_pref=512):
    """Fused equivalent of MultiDEC.forward + MultiDEC.soft_assignemt.

    Returns (image_z [B,Z], text_z [B,Z], q [B,K], r [B,K]).
    Per-generation tuning: tb_pref=256 pays off on v6e/v7x once B >= 256;
    keep 128 on v5e (4x128^2 MXU, bandwidth-bound).
    """
    dims = prepared["dims"]
    B = image_x.shape[0]
    assert text_x.shape[0] == B
    Dp, Zp, Kp = dims["Dp"], dims["Zp"], dims["Kp"]
    Z, K = dims["Z"], dims["K"]

    # Batch tile: multiple of 8; prefer >= 2 batch tiles when B permits so the
    # parallel axes keep both TensorCores (v7x) busy.
    tb = min(tb_pref, _round_up(B, 8))
    Bp = _round_up(B, tb)
    if Bp // tb < 2 and Bp >= 16:
        tb = max(8, (Bp // 2 // 8) * 8)
        Bp = _round_up(B, tb)

    # Reduction tile: largest multiple of 128 that divides Dp and is <= pref.
    tk = 128
    for cand in range(min(_round_up(tk_pref, 128), Dp), 127, -128):
        if Dp % cand == 0:
            tk = cand
            break

    # Activations: pad with jnp.pad, cast to bf16 for the MXU, stack modality.
    def pad_x(x, D):
        return jnp.pad(jnp.asarray(x, jnp.float32), ((0, Bp - B), (0, Dp - D)))
    x = jnp.stack([pad_x(image_x, dims["D_img"]),
                   pad_x(text_x, dims["D_txt"])]).astype(jnp.bfloat16)  # (2,Bp,Dp)

    grid = (2, Bp // tb, Dp // tk)

    # Explicit VMEM budget (double-buffered tiles + resident outputs), capped
    # at 64 MiB so it is valid on v7x as well as v5e/v6e.
    est = (2 * tb * tk * 2          # x tiles (bf16)
           + 2 * tk * Zp * 2        # W tiles (bf16)
           + 2 * 1 * Zp * 4         # bias
           + 2 * Zp * Kp * 2        # mu^T (bf16)
           + 2 * 1 * Kp * 4         # ||mu||^2
           + 2 * tb * Zp * 4        # z output block
           + 2 * tb * Kp * 4)       # q output block
    vmem_limit = min(64 * 1024 * 1024, max(32 * 1024 * 1024, 2 * est))

    z_pad, q_pad = pl.pallas_call(
        functools.partial(_fused_encode_assign_kernel,
                          alpha=float(alpha), n_clusters=K),
        out_shape=(jax.ShapeDtypeStruct((2, Bp, Zp), jnp.float32),
                   jax.ShapeDtypeStruct((2, Bp, Kp), jnp.float32)),
        grid_spec=pltpu.PrefetchScalarGridSpec(
            num_scalar_prefetch=0,
            grid=grid,
            in_specs=[
                pl.BlockSpec((None, tb, tk), lambda m, i, k: (m, i, k)),   # x
                pl.BlockSpec((None, tk, Zp), lambda m, i, k: (m, k, 0)),   # W
                pl.BlockSpec((None, 1, Zp), lambda m, i, k: (m, 0, 0)),    # bias
                pl.BlockSpec((None, Zp, Kp), lambda m, i, k: (m, 0, 0)),   # mu^T
                pl.BlockSpec((None, 1, Kp), lambda m, i, k: (m, 0, 0)),    # ||mu||^2
            ],
            out_specs=[
                pl.BlockSpec((None, tb, Zp), lambda m, i, k: (m, i, 0)),   # z
                pl.BlockSpec((None, tb, Kp), lambda m, i, k: (m, i, 0)),   # q
            ],
        ),
        compiler_params=pltpu.CompilerParams(
            dimension_semantics=("parallel", "parallel", "arbitrary"),
            vmem_limit_bytes=int(vmem_limit),
        ),
    )(x, prepared["w"], prepared["b"], prepared["mu_t"], prepared["musq"])

    image_z = z_pad[0, :B, :Z]
    text_z = z_pad[1, :B, :Z]
    q = q_pad[0, :B, :K]
    r = q_pad[1, :B, :K]
    return image_z, text_z, q, r


# ----------------------------------------------------------------------------
# MultiDEC glue (cheap elementwise/reductions on tiny [B, K] arrays)
# ----------------------------------------------------------------------------
def target_distribution(q, r):
    p_image = q ** 2 / jnp.sum(q, axis=0)
    p_image = p_image / (2.0 * jnp.sum(p_image, axis=1, keepdims=True))
    p_text = r ** 2 / jnp.sum(r, axis=0)
    p_text = p_text / (2.0 * jnp.sum(p_text, axis=1, keepdims=True))
    return p_image + p_text


# TODO(synk): loss_function (KL-div training loss), fit()/fit_predict()
# (KMeans init, SGD training loops) and save/load are host-side training
# utilities, not part of the forward pass; left unimplemented.


# ----------------------------------------------------------------------------
# Reference (pure JAX, f32) for correctness check
# ----------------------------------------------------------------------------
def _ref_soft_assign(z, mu, alpha=1.0):
    dist2 = jnp.sum((z[:, None, :] - mu[None, :, :]) ** 2, axis=2)
    q = 1.0 / (1.0 + dist2 / alpha)
    q = q ** (alpha + 1.0) / 2.0
    return q / jnp.sum(q, axis=1, keepdims=True)


if __name__ == "__main__":
    B = 8          # batch
    D_IMG = 64     # image feature dim
    D_TXT = 48     # text feature dim
    Z = 32         # latent dim (z_dim)
    K = 10         # n_clusters
    ALPHA = 1.0

    key = jax.random.PRNGKey(0)
    keys = jax.random.split(key, 8)

    image_x = jax.random.normal(keys[0], (B, D_IMG), dtype=jnp.float32)
    text_x = jax.random.normal(keys[1], (B, D_TXT), dtype=jnp.float32)

    params = {
        "img_w": jax.random.normal(keys[2], (D_IMG, Z), jnp.float32) * 0.1,
        "img_b": jax.random.normal(keys[3], (1, Z), jnp.float32) * 0.01,
        "txt_w": jax.random.normal(keys[4], (D_TXT, Z), jnp.float32) * 0.1,
        "txt_b": jax.random.normal(keys[5], (1, Z), jnp.float32) * 0.01,
        "img_mu": jax.random.normal(keys[6], (K, Z), jnp.float32),
        "txt_mu": jax.random.normal(keys[7], (K, Z), jnp.float32),
    }

    # One-time parameter padding / transpose / bf16 cast (hoisted out of forward).
    prepared = prepare_multidec_params(params)

    # Fused forward + soft assignment (both modalities, one launch).
    image_z, text_z, q, r = multidec_forward_soft_assign(
        image_x, text_x, prepared, alpha=ALPHA)
    image_z, text_z, q, r = jax.block_until_ready((image_z, text_z, q, r))
    p = jax.block_until_ready(target_distribution(q, r))

    # Checks against the pure-f32 JAX reference.  Tolerances relaxed to ~1e-2
    # relative because the MXU operands are bf16 (f32 accumulation).
    ref_image_z = image_x @ params["img_w"] + params["img_b"]
    ref_text_z = text_x @ params["txt_w"] + params["txt_b"]
    ref_q = _ref_soft_assign(ref_image_z, params["img_mu"], ALPHA)
    ref_r = _ref_soft_assign(ref_text_z, params["txt_mu"], ALPHA)

    assert image_z.shape == (B, Z) and text_z.shape == (B, Z)
    assert q.shape == (B, K) and r.shape == (B, K) and p.shape == (B, K)
    assert jnp.allclose(image_z, ref_image_z, atol=3e-2, rtol=3e-2)
    assert jnp.allclose(text_z, ref_text_z, atol=3e-2, rtol=3e-2)
    assert jnp.allclose(q, ref_q, atol=2e-2, rtol=3e-2)
    assert jnp.allclose(r, ref_r, atol=2e-2, rtol=3e-2)
    assert jnp.allclose(jnp.sum(q, axis=1), jnp.ones((B,)), atol=1e-5)
    assert jnp.allclose(jnp.sum(r, axis=1), jnp.ones((B,)), atol=1e-5)

    print("KERNEL_OK")
</pallas_src>

<mosaic_0001>
module attributes {stable_mosaic.version = 11 : i64} {
  func.func @_fused_encode_assign_kernel(%arg0: i32, %arg1: i32, %arg2: i32, %arg3: memref<1x8x128xbf16, #tpu.memory_space<vmem>>, %arg4: memref<1x128x128xbf16, #tpu.memory_space<vmem>>, %arg5: memref<1x1x128xf32, #tpu.memory_space<vmem>>, %arg6: memref<1x128x128xbf16, #tpu.memory_space<vmem>>, %arg7: memref<1x1x128xf32, #tpu.memory_space<vmem>>, %arg8: memref<1x8x128xf32, #tpu.memory_space<vmem>>, %arg9: memref<1x8x128xf32, #tpu.memory_space<vmem>>) attributes {dimension_semantics = [#tpu.dimension_semantics<parallel>, #tpu.dimension_semantics<parallel>, #tpu.dimension_semantics<arbitrary>], iteration_bounds = array<i64: 2, 1, 1>, scalar_prefetch = 0 : i64, scratch_operands = 0 : i64, tpu.core_type = #tpu.core_type<tc>, window_params = [{transform_indices = @transform_0, window_bounds = array<i64: 1, 8, 128>}, {transform_indices = @transform_1, window_bounds = array<i64: 1, 128, 128>}, {transform_indices = @transform_2, window_bounds = array<i64: 1, 1, 128>}, {transform_indices = @transform_3, window_bounds = array<i64: 1, 128, 128>}, {transform_indices = @transform_4, window_bounds = array<i64: 1, 1, 128>}, {transform_indices = @transform_5, window_bounds = array<i64: 1, 8, 128>}, {transform_indices = @transform_6, window_bounds = array<i64: 1, 8, 128>}]} {
    %c0_i32 = arith.constant 0 : i32
    %0 = arith.cmpi eq, %arg2, %c0_i32 : i32
    %1 = arith.extui %0 : i1 to i32
    %c0_i32_0 = arith.constant 0 : i32
    %2 = arith.cmpi ne, %1, %c0_i32_0 : i32
    scf.if %2 {
      %cst_14 = arith.constant 0.000000e+00 : f32
      %17 = vector.broadcast %cst_14 : f32 to vector<8x128xf32>
      %c0_15 = arith.constant 0 : index
      %c0_16 = arith.constant 0 : index
      %c0_17 = arith.constant 0 : index
      %18 = vector.load %arg8[%c0_15, %c0_16, %c0_17] : memref<1x8x128xf32, #tpu.memory_space<vmem>>, vector<1x8x128xf32>
      %19 = vector.shape_cast %18 : vector<1x8x128xf32> to vector<8x128xf32>
      %20 = vector.shape_cast %17 : vector<8x128xf32> to vector<1x8x128xf32>
      tpu.vector_store %arg8[%c0_15, %c0_16, %c0_17], %20 {strides = array<i32>} : memref<1x8x128xf32, #tpu.memory_space<vmem>>, vector<1x8x128xf32>,
    } else {
    }
    %c0 = arith.constant 0 : index
    %c0_1 = arith.constant 0 : index
    %c0_2 = arith.constant 0 : index
    %3 = vector.load %arg8[%c0, %c0_1, %c0_2] : memref<1x8x128xf32, #tpu.memory_space<vmem>>, vector<1x8x128xf32>
    %4 = vector.shape_cast %3 : vector<1x8x128xf32> to vector<8x128xf32>
    %c0_3 = arith.constant 0 : index
    %c0_4 = arith.constant 0 : index
    %c0_5 = arith.constant 0 : index
    %5 = vector.load %arg3[%c0_3, %c0_4, %c0_5] : memref<1x8x128xbf16, #tpu.memory_space<vmem>>, vector<1x8x128xbf16>
    %6 = vector.shape_cast %5 : vector<1x8x128xbf16> to vector<8x128xbf16>
    %c0_6 = arith.constant 0 : index
    %c0_7 = arith.constant 0 : index
    %c0_8 = arith.constant 0 : index
    %7 = vector.load %arg4[%c0_6, %c0_7, %c0_8] : memref<1x128x128xbf16, #tpu.memory_space<vmem>>, vector<1x128x128xbf16>
    %8 = vector.shape_cast %7 : vector<1x128x128xbf16> to vector<128x128xbf16>
    %cst = arith.constant dense<0.000000e+00> : vector<8x128xf32>
    %9 = tpu.matmul %6, %8, %cst {dimension_numbers = #tpu.dot_dimension_numbers<[1], [0], [0], [1], [0, 0, 1, 1], [], []>} : vector<8x128xbf16>, vector<128x128xbf16>, vector<8x128xf32> -> vector<8x128xf32>
    %10 = arith.addf %4, %9 : vector<8x128xf32>
    %c0_9 = arith.constant 0 : index
    %c0_10 = arith.constant 0 : index
    %c0_11 = arith.constant 0 : index
    %11 = vector.load %arg8[%c0_9, %c0_10, %c0_11] : memref<1x8x128xf32, #tpu.memory_space<vmem>>, vector<1x8x128xf32>
    %12 = vector.shape_cast %11 : vector<1x8x128xf32> to vector<8x128xf32>
    %13 = vector.shape_cast %10 : vector<8x128xf32> to vector<1x8x128xf32>
    tpu.vector_store %arg8[%c0_9, %c0_10, %c0_11], %13 {strides = array<i32>} : memref<1x8x128xf32, #tpu.memory_space<vmem>>, vector<1x8x128xf32>,
    %c0_i32_12 = arith.constant 0 : i32
    %14 = arith.cmpi eq, %arg2, %c0_i32_12 : i32
    %15 = arith.extui %14 : i1 to i32
    %c0_i32_13 = arith.constant 0 : i32
    %16 = arith.cmpi ne, %15, %c0_i32_13 : i32
    scf.if %16 {
      %c0_14 = arith.constant 0 : index
      %c0_15 = arith.constant 0 : index
      %c0_16 = arith.constant 0 : index
      %17 = vector.load %arg8[%c0_14, %c0_15, %c0_16] : memref<1x8x128xf32, #tpu.memory_space<vmem>>, vector<1x8x128xf32>
      %18 = vector.shape_cast %17 : vector<1x8x128xf32> to vector<8x128xf32>
      %c0_17 = arith.constant 0 : index
      %c0_18 = arith.constant 0 : index
      %c0_19 = arith.constant 0 : index
      %19 = vector.load %arg5[%c0_17, %c0_18, %c0_19] : memref<1x1x128xf32, #tpu.memory_space<vmem>>, vector<1x1x128xf32>
      %20 = vector.shape_cast %19 : vector<1x1x128xf32> to vector<1x128xf32>
      %21 = vector.broadcast %20 : vector<1x128xf32> to vector<8x128xf32>
      %22 = arith.addf %18, %21 : vector<8x128xf32>
      %c0_20 = arith.constant 0 : index
      %c0_21 = arith.constant 0 : index
      %c0_22 = arith.constant 0 : index
      %23 = vector.load %arg8[%c0_20, %c0_21, %c0_22] : memref<1x8x128xf32, #tpu.memory_space<vmem>>, vector<1x8x128xf32>
      %24 = vector.shape_cast %23 : vector<1x8x128xf32> to vector<8x128xf32>
      %25 = vector.shape_cast %22 : vector<8x128xf32> to vector<1x8x128xf32>
      tpu.vector_store %arg8[%c0_20, %c0_21, %c0_22], %25 {strides = array<i32>} : memref<1x8x128xf32, #tpu.memory_space<vmem>>, vector<1x8x128xf32>,
      %26 = arith.mulf %22, %22 : vector<8x128xf32>
      %cst_23 = arith.constant dense<0.000000e+00> : vector<8xf32>
      %27 = vector.multi_reduction <add>, %26, %cst_23 [1] : vector<8x128xf32> to vector<8xf32>
      %28 = vector.shape_cast %27 : vector<8xf32> to vector<8x1xf32>
      %29 = arith.truncf %22 : vector<8x128xf32> to vector<8x128xbf16>
      %c0_24 = arith.constant 0 : index
      %c0_25 = arith.constant 0 : index
      %c0_26 = arith.constant 0 : index
      %30 = vector.load %arg6[%c0_24, %c0_25, %c0_26] : memref<1x128x128xbf16, #tpu.memory_space<vmem>>, vector<1x128x128xbf16>
      %31 = vector.shape_cast %30 : vector<1x128x128xbf16> to vector<128x128xbf16>
      %cst_27 = arith.constant dense<0.000000e+00> : vector<8x128xf32>
      %32 = tpu.matmul %29, %31, %cst_27 {dimension_numbers = #tpu.dot_dimension_numbers<[1], [0], [0], [1], [0, 0, 1, 1], [], []>} : vector<8x128xbf16>, vector<128x128xbf16>, vector<8x128xf32> -> vector<8x128xf32>
      %c0_28 = arith.constant 0 : index
      %c0_29 = arith.constant 0 : index
      %c0_30 = arith.constant 0 : index
      %33 = vector.load %arg7[%c0_28, %c0_29, %c0_30] : memref<1x1x128xf32, #tpu.memory_space<vmem>>, vector<1x1x128xf32>
      %34 = vector.shape_cast %33 : vector<1x1x128xf32> to vector<1x128xf32>
      %35 = vector.broadcast %28 : vector<8x1xf32> to vector<8x128xf32>
      %36 = vector.broadcast %34 : vector<1x128xf32> to vector<8x128xf32>
      %37 = arith.addf %35, %36 : vector<8x128xf32>
      %cst_31 = arith.constant 2.000000e+00 : f32
      %38 = vector.broadcast %cst_31 : f32 to vector<8x128xf32>
      %39 = arith.mulf %38, %32 : vector<8x128xf32>
      %40 = arith.subf %37, %39 : vector<8x128xf32>
      %cst_32 = arith.constant 0.000000e+00 : f32
      %41 = vector.broadcast %cst_32 : f32 to vector<8x128xf32>
      %42 = arith.maximumf %40, %41 : vector<8x128xf32>
      %cst_33 = arith.constant 1.000000e+00 : f32
      %43 = vector.broadcast %cst_33 : f32 to vector<8x128xf32>
      %44 = arith.mulf %42, %43 : vector<8x128xf32>
      %cst_34 = arith.constant 1.000000e+00 : f32
      %45 = vector.broadcast %cst_34 : f32 to vector<8x128xf32>
      %46 = arith.addf %45, %44 : vector<8x128xf32>
      %47 = tpu.reciprocal %46 {approx = true} : vector<8x128xf32> -> vector<8x128xf32>
      %48 = arith.mulf %47, %47 : vector<8x128xf32>
      %49 = tpu.iota {dimensions = array<i32: 1>} : vector<8x128xi32>
      %c10_i32 = arith.constant 10 : i32
      %50 = vector.broadcast %c10_i32 : i32 to vector<8x128xi32>
      %51 = arith.cmpi slt, %49, %50 : vector<8x128xi32>
      %cst_35 = arith.constant 0.000000e+00 : f32
      %52 = vector.broadcast %cst_35 : f32 to vector<8x128xf32>
      %53 = arith.select %51, %48, %52 : vector<8x128xi1>, vector<8x128xf32>
      %cst_36 = arith.constant dense<0.000000e+00> : vector<8xf32>
      %54 = vector.multi_reduction <add>, %53, %cst_36 [1] : vector<8x128xf32> to vector<8xf32>
      %55 = vector.shape_cast %54 : vector<8xf32> to vector<8x1xf32>
      %56 = tpu.reciprocal %55 : vector<8x1xf32> -> vector<8x1xf32>
      %57 = vector.broadcast %56 : vector<8x1xf32> to vector<8x128xf32>
      %58 = arith.mulf %53, %57 : vector<8x128xf32>
      %c0_37 = arith.constant 0 : index
      %c0_38 = arith.constant 0 : index
      %c0_39 = arith.constant 0 : index
      %59 = vector.load %arg9[%c0_37, %c0_38, %c0_39] : memref<1x8x128xf32, #tpu.memory_space<vmem>>, vector<1x8x128xf32>
      %60 = vector.shape_cast %59 : vector<1x8x128xf32> to vector<8x128xf32>
      %61 = vector.shape_cast %58 : vector<8x128xf32> to vector<1x8x128xf32>
      tpu.vector_store %arg9[%c0_37, %c0_38, %c0_39], %61 {strides = array<i32>} : memref<1x8x128xf32, #tpu.memory_space<vmem>>, vector<1x8x128xf32>,
    } else {
    }
    return
  }
  func.func @transform_0(%arg0: i32, %arg1: i32, %arg2: i32) -> (i32, i32, i32) {
    %c0_i32 = arith.constant 0 : i32
    return %arg0, %arg1, %arg2 : i32, i32, i32
  }
  func.func @transform_1(%arg0: i32, %arg1: i32, %arg2: i32) -> (i32, i32, i32) {
    %c0_i32 = arith.constant 0 : i32
    %c0_i32_0 = arith.constant 0 : i32
    return %arg0, %arg2, %c0_i32 : i32, i32, i32
  }
  func.func @transform_2(%arg0: i32, %arg1: i32, %arg2: i32) -> (i32, i32, i32) {
    %c0_i32 = arith.constant 0 : i32
    %c0_i32_0 = arith.constant 0 : i32
    %c0_i32_1 = arith.constant 0 : i32
    return %arg0, %c0_i32, %c0_i32_0 : i32, i32, i32
  }
  func.func @transform_3(%arg0: i32, %arg1: i32, %arg2: i32) -> (i32, i32, i32) {
    %c0_i32 = arith.constant 0 : i32
    %c0_i32_0 = arith.constant 0 : i32
    %c0_i32_1 = arith.constant 0 : i32
    return %arg0, %c0_i32, %c0_i32_0 : i32, i32, i32
  }
  func.func @transform_4(%arg0: i32, %arg1: i32, %arg2: i32) -> (i32, i32, i32) {
    %c0_i32 = arith.constant 0 : i32
    %c0_i32_0 = arith.constant 0 : i32
    %c0_i32_1 = arith.constant 0 : i32
    return %arg0, %c0_i32, %c0_i32_0 : i32, i32, i32
  }
  func.func @transform_5(%arg0: i32, %arg1: i32, %arg2: i32) -> (i32, i32, i32) {
    %c0_i32 = arith.constant 0 : i32
    %c0_i32_0 = arith.constant 0 : i32
    return %arg0, %arg1, %c0_i32 : i32, i32, i32
  }
  func.func @transform_6(%arg0: i32, %arg1: i32, %arg2: i32) -> (i32, i32, i32) {
    %c0_i32 = arith.constant 0 : i32
    %c0_i32_0 = arith.constant 0 : i32
    return %arg0, %arg1, %c0_i32 : i32, i32, i32
  }
}

</mosaic_0001>

<llo_original>
// kernel: tpu_custom_call.1
$region0: #{tpu_custom_call.1}
  #allocation0 [shape = 'u32[]', space=smem, size = 0x4, offset = 0x4, fixed_abs, tag = 'smem constant byte address 0x4 - core index']
  #allocation1 [shape = 'u32[144,128]{1,0:T(1,128)}', space=vmem, size = 0x12000, scoped, tag = 'internal scratch']
  %s0 = inlined_call_operand.hbm [shape: bf16[2,8,128], index: 0, kind: input, shape index: {}]
  %s1 = inlined_call_operand.hbm [shape: bf16[2,128,128], index: 1, kind: input, shape index: {}]
  %s2 = inlined_call_operand.vmem [shape: f32[2,1,128], index: 2, kind: input, shape index: {}]
  %s3 = inlined_call_operand.hbm [shape: bf16[2,128,128], index: 3, kind: input, shape index: {}]
  %s4 = inlined_call_operand.vmem [shape: f32[2,1,128], index: 4, kind: input, shape index: {}]
  %s5 = inlined_call_operand.hbm [shape: f32[2,8,128], index: 5, kind: output, shape index: {0}]
  %s6 = inlined_call_operand.hbm [shape: f32[2,8,128], index: 6, kind: output, shape index: {1}]
  %7 = xla_tuple %s5, %s6
  %s8 = sld [smem:[#allocation0]]
  $region81: #{tpu_custom_call.1} parent=0
    _
  %s10 = ssub.s32 1, %s8
  %s11 = scalar_select 0, %s10, %s8
  $region1: #{tpu_custom_call.1} parent=0
    #allocation2 [shape = 'u8[4096]{0}', space=vmem, size = 0x1000, scoped, tag = 'input window, operand 0']
    #allocation3 [shape = 's32[2]{0}', space=sflag, size = 0x8, scoped, tag = 'scoped memory for tpu_custom_call.1']
    #allocation4 [shape = 's32[2]{0}', space=sflag, size = 0x8, scoped, tag = 'scoped memory for tpu_custom_call.1']
    #allocation5 [shape = 'u8[65536]{0}', space=vmem, size = 0x10000, scoped, tag = 'input window, operand 1']
    #allocation6 [shape = 's32[2]{0}', space=sflag, size = 0x8, scoped, tag = 'scoped memory for tpu_custom_call.1']
    #allocation7 [shape = 'u8[65536]{0}', space=vmem, size = 0x10000, scoped, tag = 'input window, operand 3']
    #allocation8 [shape = 'u8[8192]{0}', space=vmem, size = 0x2000, scoped, tag = 'output window, operand 0']
    #allocation9 [shape = 'u8[8192]{0}', space=vmem, size = 0x2000, scoped, tag = 'output window, operand 1']
    #allocation10 [shape = 's32[2]{0}', space=sflag, size = 0x8, scoped, tag = 'scoped memory for tpu_custom_call.1']
    %12 = vsyncpa [#allocation3], 0
    %s13 = scalar_lea.sflag [#allocation3], 1
    %14 = vsyncpa %s13, 0
    %15 = vsyncpa [#allocation6], 0
    %s16 = scalar_lea.sflag [#allocation6], 1
    %17 = vsyncpa %s16, 0
    %18 = vsyncpa [#allocation4], 0
    %s19 = scalar_lea.sflag [#allocation4], 1
    %20 = vsyncpa %s19, 0
    %21 = vsyncpa [#allocation10], 0
    %s22 = scalar_lea.sflag [#allocation10], 1
    %23 = vsyncpa %s22, 0
    loop: start=0, step=1, limit=4
    $region2: #{tpu_custom_call.1} parent=1 // loop_pre_header
      _
    $region3: #{tpu_custom_call.1} parent=1 // loop_header
      %s25 = sphi 0, %s29
      %p26 = scmp.ge.s32.totalorder %s25, 4
      %s32 = sphi 0, %s51
      %s33 = sphi 0, %s47
      %s34 = sphi 0, %s43
      %s35 = sphi 0, %s32
      %s36 = sphi 0, %s33
      %s37 = sphi 0, %s34
      %s38 = sphi 0, %s35
      %s39 = sphi 0, %s36
      %s40 = sphi 0, %s37
      %s58 = sphi 0, %s60
      %s61 = sphi 0, %s58
      %s62 = sphi 0, %s61
      %s78 = sphi 0, %s62
      %s86 = sphi 0, %s88
      %s89 = sphi 0, %s86
      %s90 = sphi 0, %s89
      %s106 = sphi 0, %s90
      %s112 = sphi 0, %s114
      %s115 = sphi 0, %s112
      %s116 = sphi 0, %s115
      %s132 = sphi 0, %s116
      %s138 = sphi 0, %s140
      %s141 = sphi 0, %s138
      %s142 = sphi 0, %s141
      %s158 = sphi 0, %s142
      %s164 = sphi 0, %s166
      %s167 = sphi 0, %s164
      %s168 = sphi 0, %s167
      %s184 = sphi 0, %s168
      %s192 = sphi 0, %s194
      %s195 = sphi 0, %s192
      %s196 = sphi 0, %s195
      %s212 = sphi 0, %s196
      %s220 = sphi 0, %s222
      %s223 = sphi 0, %s220
      %s224 = sphi 0, %s223
      %s240 = sphi 0, %s224
    $region4: #{tpu_custom_call.1} parent=1 // loop_header_branch
      %28 = sbr.rel (%p26) target = $region8
    $region5: #{tpu_custom_call.1} parent=1 // loop_body
      %s30 = ssub.s32 %s25, 1
      %s31 = ssub.s32 %s25, 2
      %s41 = sadd.s32 1, %s34
      %p42 = scmp.ge.s32.totalorder %s41, 1
      %s43 = scalar_select %p42, 0, %s41
      %s44 = sadd.s32 1, %s33
      %s45 = scalar_select %p42, %s44, %s33
      %p46 = scmp.ge.s32.totalorder %s45, 1
      %s47 = scalar_select %p46, 0, %s45
      %s48 = sadd.s32 1, %s32
      %s49 = scalar_select %p46, %s48, %s32
      %p50 = scmp.ge.s32.totalorder %s49, 2
      %s51 = scalar_select %p50, 0, %s49
      %s52 = ssub.s32 %s32, %s51
      %s53 = ssub.s32 %s33, %s47
      %s54 = sor.u32 %s52, %s53
      %s55 = ssub.s32 %s34, %s43
      %s56 = sor.u32 %s54, %s55
      %p57 = scmp.eq.s32.totalorder %s56, 0
      %s59 = sadd.s32 %s58, 1
      %s60 = scalar_select %p57, %s58, %s59
      %p63 = pneg %p57
      %p64 = scmp.eq.s32.totalorder %s25, 1
      %p65 = por %p63, %p64
      %p66 = scmp.ne.s32.totalorder %s58, %s61
      %p67 = scmp.eq.s32.totalorder %s25, 0
      %p68 = por %p66, %p67
      %p69 = scmp.ne.s32.totalorder %s58, %s61
      %p70 = scmp.eq.s32.totalorder %s30, 1
      %p71 = por %p69, %p70
      %p72 = scmp.ne.s32.totalorder %s61, %s62
      %p73 = scmp.eq.s32.totalorder %s30, 0
      %p74 = por %p72, %p73
      %p75 = scmp.ne.s32.totalorder %s61, %s62
      %p76 = scmp.eq.s32.totalorder %s31, 1
      %p77 = por %p75, %p76
      %p79 = scmp.ne.s32.totalorder %s62, %s78
      %p80 = scmp.eq.s32.totalorder %s31, 0
      %p81 = por %p79, %p80
      %s82 = ssub.s32 %s32, %s51
      %s83 = ssub.s32 %s34, %s43
      %s84 = sor.u32 %s82, %s83
      %p85 = scmp.eq.s32.totalorder %s84, 0
      %s87 = sadd.s32 %s86, 1
      %s88 = scalar_select %p85, %s86, %s87
      %p91 = pneg %p85
      %p92 = scmp.eq.s32.totalorder %s25, 1
      %p93 = por %p91, %p92
      %p94 = scmp.ne.s32.totalorder %s86, %s89
      %p95 = scmp.eq.s32.totalorder %s25, 0
      %p96 = por %p94, %p95
      %p97 = scmp.ne.s32.totalorder %s86, %s89
      %p98 = scmp.eq.s32.totalorder %s30, 1
      %p99 = por %p97, %p98
      %p100 = scmp.ne.s32.totalorder %s89, %s90
      %p101 = scmp.eq.s32.totalorder %s30, 0
      %p102 = por %p100, %p101
      %p103 = scmp.ne.s32.totalorder %s89, %s90
      %p104 = scmp.eq.s32.totalorder %s31, 1
      %p105 = por %p103, %p104
      %p107 = scmp.ne.s32.totalorder %s90, %s106
      %p108 = scmp.eq.s32.totalorder %s31, 0
      %p109 = por %p107, %p108
      %s110 = ssub.s32 %s32, %s51
      %p111 = scmp.eq.s32.totalorder %s110, 0
      %s113 = sadd.s32 %s112, 1
      %s114 = scalar_select %p111, %s112, %s113
      %p117 = pneg %p111
      %p118 = scmp.eq.s32.totalorder %s25, 1
      %p119 = por %p117, %p118
      %p120 = scmp.ne.s32.totalorder %s112, %s115
      %p121 = scmp.eq.s32.totalorder %s25, 0
      %p122 = por %p120, %p121
      %p123 = scmp.ne.s32.totalorder %s112, %s115
      %p124 = scmp.eq.s32.totalorder %s30, 1
      %p125 = por %p123, %p124
      %p126 = scmp.ne.s32.totalorder %s115, %s116
      %p127 = scmp.eq.s32.totalorder %s30, 0
      %p128 = por %p126, %p127
      %p129 = scmp.ne.s32.totalorder %s115, %s116
      %p130 = scmp.eq.s32.totalorder %s31, 1
      %p131 = por %p129, %p130
      %p133 = scmp.ne.s32.totalorder %s116, %s132
      %p134 = scmp.eq.s32.totalorder %s31, 0
      %p135 = por %p133, %p134
      %s136 = ssub.s32 %s32, %s51
      %p137 = scmp.eq.s32.totalorder %s136, 0
      %s139 = sadd.s32 %s138, 1
      %s140 = scalar_select %p137, %s138, %s139
      %p143 = pneg %p137
      %p144 = scmp.eq.s32.totalorder %s25, 1
      %p145 = por %p143, %p144
      %p146 = scmp.ne.s32.totalorder %s138, %s141
      %p147 = scmp.eq.s32.totalorder %s25, 0
      %p148 = por %p146, %p147
      %p149 = scmp.ne.s32.totalorder %s138, %s141
      %p150 = scmp.eq.s32.totalorder %s30, 1
      %p151 = por %p149, %p150
      %p152 = scmp.ne.s32.totalorder %s141, %s142
      %p153 = scmp.eq.s32.totalorder %s30, 0
      %p154 = por %p152, %p153
      %p155 = scmp.ne.s32.totalorder %s141, %s142
      %p156 = scmp.eq.s32.totalorder %s31, 1
      %p157 = por %p155, %p156
      %p159 = scmp.ne.s32.totalorder %s142, %s158
      %p160 = scmp.eq.s32.totalorder %s31, 0
      %p161 = por %p159, %p160
      %s162 = ssub.s32 %s32, %s51
      %p163 = scmp.eq.s32.totalorder %s162, 0
      %s165 = sadd.s32 %s164, 1
      %s166 = scalar_select %p163, %s164, %s165
      %p169 = pneg %p163
      %p170 = scmp.eq.s32.totalorder %s25, 1
      %p171 = por %p169, %p170
      %p172 = scmp.ne.s32.totalorder %s164, %s167
      %p173 = scmp.eq.s32.totalorder %s25, 0
      %p174 = por %p172, %p173
      %p175 = scmp.ne.s32.totalorder %s164, %s167
      %p176 = scmp.eq.s32.totalorder %s30, 1
      %p177 = por %p175, %p176
      %p178 = scmp.ne.s32.totalorder %s167, %s168
      %p179 = scmp.eq.s32.totalorder %s30, 0
      %p180 = por %p178, %p179
      %p181 = scmp.ne.s32.totalorder %s167, %s168
      %p182 = scmp.eq.s32.totalorder %s31, 1
      %p183 = por %p181, %p182
      %p185 = scmp.ne.s32.totalorder %s168, %s184
      %p186 = scmp.eq.s32.totalorder %s31, 0
      %p187 = por %p185, %p186
      %s188 = ssub.s32 %s32, %s51
      %s189 = ssub.s32 %s33, %s47
      %s190 = sor.u32 %s188, %s189
      %p191 = scmp.eq.s32.totalorder %s190, 0
      %s193 = sadd.s32 %s192, 1
      %s194 = scalar_select %p191, %s192, %s193
      %p197 = pneg %p191
      %p198 = scmp.eq.s32.totalorder %s25, 1
      %p199 = por %p197, %p198
      %p200 = scmp.ne.s32.totalorder %s192, %s195
      %p201 = scmp.eq.s32.totalorder %s25, 0
      %p202 = por %p200, %p201
      %p203 = scmp.ne.s32.totalorder %s192, %s195
      %p204 = scmp.eq.s32.totalorder %s30, 1
      %p205 = por %p203, %p204
      %p206 = scmp.ne.s32.totalorder %s195, %s196
      %p207 = scmp.eq.s32.totalorder %s30, 0
      %p208 = por %p206, %p207
      %p209 = scmp.ne.s32.totalorder %s195, %s196
      %p210 = scmp.eq.s32.totalorder %s31, 1
      %p211 = por %p209, %p210
      %p213 = scmp.ne.s32.totalorder %s196, %s212
      %p214 = scmp.eq.s32.totalorder %s31, 0
      %p215 = por %p213, %p214
      %s216 = ssub.s32 %s32, %s51
      %s217 = ssub.s32 %s33, %s47
      %s218 = sor.u32 %s216, %s217
      %p219 = scmp.eq.s32.totalorder %s218, 0
      %s221 = sadd.s32 %s220, 1
      %s222 = scalar_select %p219, %s220, %s221
      %p225 = pneg %p219
      %p226 = scmp.eq.s32.totalorder %s25, 1
      %p227 = por %p225, %p226
      %p228 = scmp.ne.s32.totalorder %s220, %s223
      %p229 = scmp.eq.s32.totalorder %s25, 0
      %p230 = por %p228, %p229
      %p231 = scmp.ne.s32.totalorder %s220, %s223
      %p232 = scmp.eq.s32.totalorder %s30, 1
      %p233 = por %p231, %p232
      %p234 = scmp.ne.s32.totalorder %s223, %s224
      %p235 = scmp.eq.s32.totalorder %s30, 0
      %p236 = por %p234, %p235
      %p237 = scmp.ne.s32.totalorder %s223, %s224
      %p238 = scmp.eq.s32.totalorder %s31, 1
      %p239 = por %p237, %p238
      %p241 = scmp.ne.s32.totalorder %s224, %s240
      %p242 = scmp.eq.s32.totalorder %s31, 0
      %p243 = por %p241, %p242
      %p244 = scmp.le.s32.totalorder 1, %s25
      %p245 = scmp.lt.s32.totalorder %s25, 3
      %p246 = pnand %p244, %p245
      %p247 = pneg %p246
      // Predicated region
      $region9: #{tpu_custom_call.1} parent=5 // pred_check
        _
      $region10: #{tpu_custom_call.1} parent=5 // pred_check_branch
        %249 = sbr.rel (%p246) target = $region12
      $region11: #{tpu_custom_call.1} parent=5 // pred_region
        %s250 = ssub.s32 %s25, 1
      $region12: #{tpu_custom_call.1} parent=5 // pred_fallthru
        _
      %p251 = scmp.lt.s32.totalorder %s25, 2
      // Predicated region
      $region13: #{tpu_custom_call.1} parent=5 // pred_check
        %p252 = pneg %p251
      $region14: #{tpu_custom_call.1} parent=5 // pred_check_branch
        %254 = sbr.rel (%p252) target = $region16
      $region15: #{tpu_custom_call.1} parent=5 // pred_region
        // Predicated region
        $region17: #{tpu_custom_call.1} parent=15 // pred_check
          %p255 = pneg %p68
        $region18: #{tpu_custom_call.1} parent=15 // pred_check_branch
          %257 = sbr.rel (%p255) target = $region20
        $region19: #{tpu_custom_call.1} parent=15 // pred_region
          %s258 = sand.u32 %s58, 1
          %s259 = scalar_lea.sflag [#allocation3], %s258
          %s260 = sand.u32 %s58, 1
          %s261 = smul.addr %s260, 4
          %s262 = scalar_lea.vmem [#allocation2], %s261
          %s264 = ssub.s32 64, 64
          %265 = vsyncadd %s259, %s264
          %s266 = sadd.s32 %s34, %s33
          %s267 = sadd.s32 %s266, %s32
          %s268 = smul.addr %s267, 64
          %s269 = scalar_lea.hbm %s0, %s268
          %s271 = sshll.u32 %s262, 4
          %s272 = int_to_ptr.vmem [resolvable:$true] %s271
          %274 = dma.hbm_to_vmem [thread:$0]  %s269, 64, %s272, %s259
        $region20: #{tpu_custom_call.1} parent=15 // pred_fallthru
          _
        // Predicated region
        $region21: #{tpu_custom_call.1} parent=15 // pred_check
          %p275 = pneg %p96
        $region22: #{tpu_custom_call.1} parent=15 // pred_check_branch
          %277 = sbr.rel (%p275) target = $region24
        $region23: #{tpu_custom_call.1} parent=15 // pred_region
          %s278 = sand.u32 %s25, 1
          %s279 = scalar_lea.sflag [#allocation6], %s278
          %s280 = sand.u32 %s86, 1
          %s281 = smul.addr %s280, 64
          %s282 = scalar_lea.vmem [#allocation5], %s281
          %s283 = smul.u32 16, %s34
          %s285 = ssub.s32 1024, 1024
          %286 = vsyncadd %s279, %s285
          %s287 = smul.addr %s32, 16
          %s288 = sadd.s32 %s283, %s287
          %s289 = smul.addr %s288, 64
          %s290 = scalar_lea.hbm %s1, %s289
          %s291 = sshll.u32 %s282, 4
          %s292 = int_to_ptr.vmem [resolvable:$true] %s291
          %297 = dma.hbm_to_vmem [thread:$0]  %s290, 1024, %s292, %s279, 64, 64, 4
        $region24: #{tpu_custom_call.1} parent=15 // pred_fallthru
          _
        // Predicated region
        $region25: #{tpu_custom_call.1} parent=15 // pred_check
          %p298 = pneg %p122
        $region26: #{tpu_custom_call.1} parent=15 // pred_check_branch
          %300 = sbr.rel (%p298) target = $region28
        $region27: #{tpu_custom_call.1} parent=15 // pred_region
          %p301 = scmp.lt.s32.totalorder %s32, 1
          %s302 = scalar_select %p301, %s32, 1
          %s303 = scalar_lea.vmem %s2, %s302
        $region28: #{tpu_custom_call.1} parent=15 // pred_fallthru
          _
        // Predicated region
        $region29: #{tpu_custom_call.1} parent=15 // pred_check
          %p304 = pneg %p148
        $region30: #{tpu_custom_call.1} parent=15 // pred_check_branch
          %306 = sbr.rel (%p304) target = $region32
        $region31: #{tpu_custom_call.1} parent=15 // pred_region
          %s307 = sand.u32 %s25, 1
          %s308 = scalar_lea.sflag [#allocation6], %s307
          %s309 = sand.u32 %s138, 1
          %s310 = smul.addr %s309, 64
          %s311 = scalar_lea.vmem [#allocation7], %s310
          %s313 = ssub.s32 1024, 1024
          %314 = vsyncadd %s308, %s313
          %s315 = smul.addr %s32, 16
          %s316 = smul.addr %s315, 64
          %s317 = scalar_lea.hbm %s3, %s316
          %s318 = sshll.u32 %s311, 4
          %s319 = int_to_ptr.vmem [resolvable:$true] %s318
          %324 = dma.hbm_to_vmem [thread:$0]  %s317, 1024, %s319, %s308, 64, 64, 4
        $region32: #{tpu_custom_call.1} parent=15 // pred_fallthru
          _
        // Predicated region
        $region33: #{tpu_custom_call.1} parent=15 // pred_check
          %p325 = pneg %p174
        $region34: #{tpu_custom_call.1} parent=15 // pred_check_branch
          %327 = sbr.rel (%p325) target = $region36
        $region35: #{tpu_custom_call.1} parent=15 // pred_region
          %p328 = scmp.lt.s32.totalorder %s32, 1
          %s329 = scalar_select %p328, %s32, 1
          %s330 = scalar_lea.vmem %s4, %s329
        $region36: #{tpu_custom_call.1} parent=15 // pred_fallthru
          _
      $region16: #{tpu_custom_call.1} parent=5 // pred_fallthru
        _
      %p331 = scmp.le.s32.totalorder 1, %s25
      %p332 = scmp.lt.s32.totalorder %s25, 3
      %p333 = pnand %p331, %p332
      %p334 = pneg %p333
      // Predicated region
      $region37: #{tpu_custom_call.1} parent=5 // pred_check
        _
      $region38: #{tpu_custom_call.1} parent=5 // pred_check_branch
        %336 = sbr.rel (%p333) target = $region40
      $region39: #{tpu_custom_call.1} parent=5 // pred_region
        %s337 = ssub.s32 %s25, 1
        %s338 = sand.u32 %s61, 1
        %s339 = scalar_lea.sflag [#allocation3], %s338
        %s340 = sand.u32 %s61, 1
        %s341 = smul.addr %s340, 4
        %s342 = scalar_lea.vmem [#allocation2], %s341
        // Predicated region
        $region41: #{tpu_custom_call.1} parent=39 // pred_check
          %p343 = pneg %p74
        $region42: #{tpu_custom_call.1} parent=39 // pred_check_branch
          %345 = sbr.rel (%p343) target = $region44
        $region43: #{tpu_custom_call.1} parent=39 // pred_region
          %346 = dma.done %s339, 64
        $region44: #{tpu_custom_call.1} parent=39 // pred_fallthru
          _
        %s347 = sand.u32 %s30, 1
        %s348 = scalar_lea.sflag [#allocation6], %s347
        %s349 = sand.u32 %s89, 1
        %s350 = smul.addr %s349, 64
        %s351 = scalar_lea.vmem [#allocation5], %s350
        // Predicated region
        $region45: #{tpu_custom_call.1} parent=39 // pred_check
          %p352 = pneg %p102
        $region46: #{tpu_custom_call.1} parent=39 // pred_check_branch
          %354 = sbr.rel (%p352) target = $region48
        $region47: #{tpu_custom_call.1} parent=39 // pred_region
          %355 = dma.done %s348, 1024
        $region48: #{tpu_custom_call.1} parent=39 // pred_fallthru
          _
        %s356 = sand.u32 %s30, 1
        %s357 = scalar_lea.sflag [#allocation6], %s356
        %s358 = sand.u32 %s141, 1
        %s359 = smul.addr %s358, 64
        %s360 = scalar_lea.vmem [#allocation7], %s359
        // Predicated region
        $region49: #{tpu_custom_call.1} parent=39 // pred_check
          %p361 = pneg %p154
        $region50: #{tpu_custom_call.1} parent=39 // pred_check_branch
          %363 = sbr.rel (%p361) target = $region52
        $region51: #{tpu_custom_call.1} parent=39 // pred_region
          %364 = dma.done %s357, 1024
        $region52: #{tpu_custom_call.1} parent=39 // pred_fallthru
          _
        %s365 = sand.u32 %s61, 1
        %s366 = scalar_lea.sflag [#allocation3], %s365
        %s367 = sand.u32 %s61, 1
        %s368 = smul.addr %s367, 4
        %s369 = scalar_lea.vmem [#allocation2], %s368
        %p370 = pneg %p74
        %p371 = pneg %p71
        %s372 = sand.u32 %s30, 1
        %s373 = scalar_lea.sflag [#allocation6], %s372
        %s374 = sand.u32 %s89, 1
        %s375 = smul.addr %s374, 64
        %s376 = scalar_lea.vmem [#allocation5], %s375
        %p377 = pneg %p102
        %p378 = pneg %p99
        %p379 = scmp.lt.s32.totalorder %s35, 1
        %s380 = scalar_select %p379, %s35, 1
        %s381 = scalar_lea.vmem %s2, %s380
        %p382 = pneg %p128
        %p383 = pneg %p125
        %s384 = sand.u32 %s30, 1
        %s385 = scalar_lea.sflag [#allocation6], %s384
        %s386 = sand.u32 %s141, 1
        %s387 = smul.addr %s386, 64
        %s388 = scalar_lea.vmem [#allocation7], %s387
        %p389 = pneg %p154
        %p390 = pneg %p151
        %p391 = scmp.lt.s32.totalorder %s35, 1
        %s392 = scalar_select %p391, %s35, 1
        %s393 = scalar_lea.vmem %s4, %s392
        %p394 = pneg %p180
        %p395 = pneg %p177
        %p396 = pneg %p208
        %p397 = pneg %p205
        %s398 = sand.u32 %s195, 1
        %s399 = scalar_lea.sflag [#allocation4], %s398
        %s400 = sand.u32 %s195, 1
        %s401 = smul.addr %s400, 8
        %s402 = scalar_lea.vmem [#allocation8], %s401
        %p403 = pneg %p236
        %p404 = pneg %p233
        %s405 = sand.u32 %s223, 1
        %s406 = scalar_lea.sflag [#allocation10], %s405
        %s407 = sand.u32 %s223, 1
        %s408 = smul.addr %s407, 8
        %s409 = scalar_lea.vmem [#allocation9], %s408
        %s410 = smul.u32 16, %s37
        %p411 = scmp.lt.s32.totalorder %s35, 1
        %s412 = scalar_select %p411, %s35, 1
        %s413 = scalar_lea.vmem %s2, %s412
        %p414 = scmp.lt.s32.totalorder %s35, 1
        %s415 = scalar_select %p414, %s35, 1
        %s416 = scalar_lea.vmem %s4, %s415
        %p418 = scmp.eq.s32.totalorder %s37, 0
        // Predicated region
        $region53: #{tpu_custom_call.1} parent=39 // pred_check
          %p419 = pneg %p418
        $region54: #{tpu_custom_call.1} parent=39 // pred_check_branch
          %421 = sbr.rel (%p419) target = $region56
        $region55: #{tpu_custom_call.1} parent=39 // pred_region
          %422 = vst [vmem:[%s402] sm:$0xff] 0.0
        $region56: #{tpu_custom_call.1} parent=39 // pred_fallthru
          _
        %v423 = vld [vmem:[%s402] sm:$0xff]
        %v424 = vld [vmem:[%s342] sm:$0xf]
        %v425 = vld [vmem:[%s351] sm:$0xf]
        %v426 = vld [vmem:[%s351 + $0x4] sm:$0xf]
        %v427 = vld [vmem:[%s351 + $0x8] sm:$0xf]
        %v428 = vld [vmem:[%s351 + $0xc] sm:$0xf]
        %v429 = vld [vmem:[%s351 + $0x10] sm:$0xf]
        %v430 = vld [vmem:[%s351 + $0x14] sm:$0xf]
        %v431 = vld [vmem:[%s351 + $0x18] sm:$0xf]
        %v432 = vld [vmem:[%s351 + $0x1c] sm:$0xf]
        %v433 = vld [vmem:[%s351 + $0x20] sm:$0xf]
        %v434 = vld [vmem:[%s351 + $0x24] sm:$0xf]
        %v435 = vld [vmem:[%s351 + $0x28] sm:$0xf]
        %v436 = vld [vmem:[%s351 + $0x2c] sm:$0xf]
        %v437 = vld [vmem:[%s351 + $0x30] sm:$0xf]
        %v438 = vld [vmem:[%s351 + $0x34] sm:$0xf]
        %v439 = vld [vmem:[%s351 + $0x38] sm:$0xf]
        %v440 = vld [vmem:[%s351 + $0x3c] sm:$0xf]
        %v457 = vunpack.c.l.b16 %v425
        %v458 = vunpack.c.l.b16 %v426
        %v459 = vunpack.c.l.b16 %v427
        %v460 = vunpack.c.l.b16 %v428
        %v461 = vunpack.c.l.b16 %v429
        %v462 = vunpack.c.l.b16 %v430
        %v463 = vunpack.c.l.b16 %v431
        %v464 = vunpack.c.l.b16 %v432
        %v465 = vunpack.c.l.b16 %v433
        %v466 = vunpack.c.l.b16 %v434
        %v467 = vunpack.c.l.b16 %v435
        %v468 = vunpack.c.l.b16 %v436
        %v469 = vunpack.c.l.b16 %v437
        %v470 = vunpack.c.l.b16 %v438
        %v471 = vunpack.c.l.b16 %v439
        %v472 = vunpack.c.l.b16 %v440
        %v473 = vpack.c.b16 %v458, %v457
        %v474 = vpack.c.b16 %v460, %v459
        %v475 = vpack.c.b16 %v462, %v461
        %v476 = vpack.c.b16 %v464, %v463
        %v477 = vpack.c.b16 %v466, %v465
        %v478 = vpack.c.b16 %v468, %v467
        %v479 = vpack.c.b16 %v470, %v469
        %v480 = vpack.c.b16 %v472, %v471
        %489 = vmatprep.subr.bf16.mxu0 0
        %490 = vmatpush1.bf16.msra.mxu0 %v473
        %491 = vmatprep.subr.bf16.mxu0 0
        %492 = vmatpush1.bf16.msra.mxu0 %v474
        %493 = vmatprep.subr.bf16.mxu0 0
        %494 = vmatpush1.bf16.msra.mxu0 %v475
        %495 = vmatprep.subr.bf16.mxu0 0
        %496 = vmatpush1.bf16.msra.mxu0 %v476
        %497 = vmatprep.subr.bf16.mxu0 0
        %498 = vmatpush1.bf16.msra.mxu0 %v477
        %499 = vmatprep.subr.bf16.mxu0 0
        %500 = vmatpush1.bf16.msra.mxu0 %v478
        %501 = vmatprep.subr.bf16.mxu0 0
        %502 = vmatpush1.bf16.msra.mxu0 %v479
        %503 = vmatprep.subr.bf16.mxu0 0
        %504 = vmatpush1.bf16.msra.mxu0 %v480
        %505 = vmatprep.subr.bf16.mxu0 0
        %506 = vmatpush1.bf16.msra.mxu0 0
        %507 = vmatprep.subr.bf16.mxu0 0
        %508 = vmatpush1.bf16.msra.mxu0 0
        %509 = vmatprep.subr.bf16.mxu0 0
        %510 = vmatpush1.bf16.msra.mxu0 0
        %511 = vmatprep.subr.bf16.mxu0 0
        %512 = vmatpush1.bf16.msra.mxu0 0
        %513 = vmatprep.subr.bf16.mxu0 0
        %514 = vmatpush1.bf16.msra.mxu0 0
        %515 = vmatprep.subr.bf16.mxu0 0
        %516 = vmatpush1.bf16.msra.mxu0 0
        %517 = vmatprep.subr.bf16.mxu0 0
        %518 = vmatpush1.bf16.msra.mxu0 0
        %519 = vmatprep.subr.bf16.mxu0 0
        %520 = vmatpush1.bf16.msra.mxu0 0
        %521 = vmatprep.mubr.bf16.mxu0 0
        %522 = vmatmul.mubr.bf16.gmra.mrb[0].mxu0 %v424
        %v523 = vpop.f32.mrb[0].mxu0
        %v524 = vadd.f32 0.0, %v523
        %v525 = vpop.f32.mrb[0].mxu0
        %v526 = vpop.f32.mrb[0].mxu0
        %v527 = vpop.f32.mrb[0].mxu0
        %528 = vdwg.mxu0
        %v529 = vadd.f32 %v423, %v524
        %530 = vst [vmem:[%s402] sm:$0xff] %v529
        // Predicated region
        $region57: #{tpu_custom_call.1} parent=39 // pred_check
          %p531 = pneg %p418
        $region58: #{tpu_custom_call.1} parent=39 // pred_check_branch
          %533 = sbr.rel (%p531) target = $region60
        $region59: #{tpu_custom_call.1} parent=39 // pred_region
          %v534 = vld [vmem:[%s402] sm:$0xff]
          %v535 = vld [vmem:[%s413] sm:$0x1]
          %v537 = vlaneseq
          %v538 = vshrl.u32 %v537, 7
          %v539 = vsub.s32 0, %v538
          %v540 = vrot.slane %v535, %v539
          %v542 = vadd.f32 %v534, %v540
          %543 = vst [vmem:[%s402] sm:$0xff] %v542
          %v544 = vmul.f32 %v542, %v542
          %545 = vadd.xlane.f32.xlu0 %v544
          %v546 = vpop.xlane.xlu0 %545
          %v547 = vpack.c.bf16 %v542, %v542
          %v548 = vld [vmem:[%s360] sm:$0xf]
          %v549 = vld [vmem:[%s360 + $0x4] sm:$0xf]
          %v550 = vld [vmem:[%s360 + $0x8] sm:$0xf]
          %v551 = vld [vmem:[%s360 + $0xc] sm:$0xf]
          %v552 = vld [vmem:[%s360 + $0x10] sm:$0xf]
          %v553 = vld [vmem:[%s360 + $0x14] sm:$0xf]
          %v554 = vld [vmem:[%s360 + $0x18] sm:$0xf]
          %v555 = vld [vmem:[%s360 + $0x1c] sm:$0xf]
          %v556 = vld [vmem:[%s360 + $0x20] sm:$0xf]
          %v557 = vld [vmem:[%s360 + $0x24] sm:$0xf]
          %v558 = vld [vmem:[%s360 + $0x28] sm:$0xf]
          %v559 = vld [vmem:[%s360 + $0x2c] sm:$0xf]
          %v560 = vld [vmem:[%s360 + $0x30] sm:$0xf]
          %v561 = vld [vmem:[%s360 + $0x34] sm:$0xf]
          %v562 = vld [vmem:[%s360 + $0x38] sm:$0xf]
          %v563 = vld [vmem:[%s360 + $0x3c] sm:$0xf]
          %v580 = vunpack.c.l.b16 %v548
          %v581 = vunpack.c.l.b16 %v549
          %v582 = vunpack.c.l.b16 %v550
          %v583 = vunpack.c.l.b16 %v551
          %v584 = vunpack.c.l.b16 %v552
          %v585 = vunpack.c.l.b16 %v553
          %v586 = vunpack.c.l.b16 %v554
          %v587 = vunpack.c.l.b16 %v555
          %v588 = vunpack.c.l.b16 %v556
          %v589 = vunpack.c.l.b16 %v557
          %v590 = vunpack.c.l.b16 %v558
          %v591 = vunpack.c.l.b16 %v559
          %v592 = vunpack.c.l.b16 %v560
          %v593 = vunpack.c.l.b16 %v561
          %v594 = vunpack.c.l.b16 %v562
          %v595 = vunpack.c.l.b16 %v563
          %v596 = vpack.c.b16 %v581, %v580
          %v597 = vpack.c.b16 %v583, %v582
          %v598 = vpack.c.b16 %v585, %v584
          %v599 = vpack.c.b16 %v587, %v586
          %v600 = vpack.c.b16 %v589, %v588
          %v601 = vpack.c.b16 %v591, %v590
          %v602 = vpack.c.b16 %v593, %v592
          %v603 = vpack.c.b16 %v595, %v594
          %612 = vmatprep.subr.bf16.mxu0 0
          %613 = vmatpush1.bf16.msra.mxu0 %v596
          %614 = vmatprep.subr.bf16.mxu0 0
          %615 = vmatpush1.bf16.msra.mxu0 %v597
          %616 = vmatprep.subr.bf16.mxu0 0
          %617 = vmatpush1.bf16.msra.mxu0 %v598
          %618 = vmatprep.subr.bf16.mxu0 0
          %619 = vmatpush1.bf16.msra.mxu0 %v599
          %620 = vmatprep.subr.bf16.mxu0 0
          %621 = vmatpush1.bf16.msra.mxu0 %v600
          %622 = vmatprep.subr.bf16.mxu0 0
          %623 = vmatpush1.bf16.msra.mxu0 %v601
          %624 = vmatprep.subr.bf16.mxu0 0
          %625 = vmatpush1.bf16.msra.mxu0 %v602
          %626 = vmatprep.subr.bf16.mxu0 0
          %627 = vmatpush1.bf16.msra.mxu0 %v603
          %628 = vmatprep.subr.bf16.mxu0 0
          %629 = vmatpush1.bf16.msra.mxu0 0
          %630 = vmatprep.subr.bf16.mxu0 0
          %631 = vmatpush1.bf16.msra.mxu0 0
          %632 = vmatprep.subr.bf16.mxu0 0
          %633 = vmatpush1.bf16.msra.mxu0 0
          %634 = vmatprep.subr.bf16.mxu0 0
          %635 = vmatpush1.bf16.msra.mxu0 0
          %636 = vmatprep.subr.bf16.mxu0 0
          %637 = vmatpush1.bf16.msra.mxu0 0
          %638 = vmatprep.subr.bf16.mxu0 0
          %639 = vmatpush1.bf16.msra.mxu0 0
          %640 = vmatprep.subr.bf16.mxu0 0
          %641 = vmatpush1.bf16.msra.mxu0 0
          %642 = vmatprep.subr.bf16.mxu0 0
          %643 = vmatpush1.bf16.msra.mxu0 0
          %644 = vmatprep.mubr.bf16.mxu0 0
          %645 = vmatmul.mubr.bf16.gmra.mrb[0].mxu0 %v547
          %v646 = vpop.f32.mrb[0].mxu0
          %v647 = vadd.f32 0.0, %v646
          %v648 = vpop.f32.mrb[0].mxu0
          %v649 = vpop.f32.mrb[0].mxu0
          %v650 = vpop.f32.mrb[0].mxu0
          %651 = vdwg.mxu0
          %v652 = vld [vmem:[%s416] sm:$0x1]
          %v654 = vlaneseq
          %v655 = vshrl.u32 %v654, 7
          %v656 = vsub.s32 0, %v655
          %v657 = vrot.slane %v652, %v656
          %v659 = vadd.f32 %v546, %v657
          %v660 = vmul.f32 %v647, 2.0
          %v661 = vsub.f32 %v659, %v660
          %v662 = vmax.f32 %v661, 0.0
          %v663 = vadd.f32 %v662, 1.0
          %v664 = vrcp.pop %v663
          %v665 = vmul.f32 %v664, %v664
          %v666 = vlaneseq
          %v667 = vand.u32 %v666, 127
          %vm668 = vcmp.lt.s32.totalorder %v667, 10
          %v669 = vsel %vm668, %v665, 0.0
          %670 = vadd.xlane.f32.xlu0 %v669
          %v671 = vpop.xlane.xlu0 %670
          %v672 = vrcp.pop %v671
          %v673 = vmul.f32 %v669, %v672
          %674 = vst [vmem:[%s409] sm:$0xff] %v673
        $region60: #{tpu_custom_call.1} parent=39 // pred_fallthru
          _
        %s675 = sand.u32 %s195, 1
        %s676 = scalar_lea.sflag [#allocation4], %s675
        %s677 = sand.u32 %s195, 1
        %s678 = smul.addr %s677, 8
        %s679 = scalar_lea.vmem [#allocation8], %s678
        %s680 = sand.u32 %s223, 1
        %s681 = scalar_lea.sflag [#allocation10], %s680
        %s682 = sand.u32 %s223, 1
        %s683 = smul.addr %s682, 8
        %s684 = scalar_lea.vmem [#allocation9], %s683
        // Predicated region
        $region61: #{tpu_custom_call.1} parent=39 // pred_check
          %p685 = pneg %p205
        $region62: #{tpu_custom_call.1} parent=39 // pred_check_branch
          %687 = sbr.rel (%p685) target = $region64
        $region63: #{tpu_custom_call.1} parent=39 // pred_region
          %s689 = ssub.s32 128, 128
          %690 = vsyncadd %s676, %s689
          %s691 = sadd.s32 %s36, %s35
          %s692 = smul.addr %s691, 128
          %s693 = scalar_lea.hbm %s5, %s692
          %s695 = sshll.u32 %s679, 4
          %s696 = int_to_ptr.vmem [resolvable:$true] %s695
          %698 = dma.vmem_to_hbm [thread:$0]  %s696, 128, %s693, %s676
        $region64: #{tpu_custom_call.1} parent=39 // pred_fallthru
          _
        // Predicated region
        $region65: #{tpu_custom_call.1} parent=39 // pred_check
          %p699 = pneg %p233
        $region66: #{tpu_custom_call.1} parent=39 // pred_check_branch
          %701 = sbr.rel (%p699) target = $region68
        $region67: #{tpu_custom_call.1} parent=39 // pred_region
          %s703 = ssub.s32 128, 128
          %704 = vsyncadd %s681, %s703
          %s705 = sadd.s32 %s36, %s35
          %s706 = smul.addr %s705, 128
          %s707 = scalar_lea.hbm %s6, %s706
          %s709 = sshll.u32 %s684, 4
          %s710 = int_to_ptr.vmem [resolvable:$true] %s709
          %712 = dma.vmem_to_hbm [thread:$0]  %s710, 128, %s707, %s681
        $region68: #{tpu_custom_call.1} parent=39 // pred_fallthru
          _
      $region40: #{tpu_custom_call.1} parent=5 // pred_fallthru
        _
      %p713 = scmp.le.s32.totalorder 2, %s25
      // Predicated region
      $region69: #{tpu_custom_call.1} parent=5 // pred_check
        %p714 = pneg %p713
      $region70: #{tpu_custom_call.1} parent=5 // pred_check_branch
        %716 = sbr.rel (%p714) target = $region72
      $region71: #{tpu_custom_call.1} parent=5 // pred_region
        %s717 = ssub.s32 %s25, 2
        // Predicated region
        $region73: #{tpu_custom_call.1} parent=71 // pred_check
          %p718 = pneg %p211
        $region74: #{tpu_custom_call.1} parent=71 // pred_check_branch
          %720 = sbr.rel (%p718) target = $region76
        $region75: #{tpu_custom_call.1} parent=71 // pred_region
          %s721 = sand.u32 %s196, 1
          %s722 = scalar_lea.sflag [#allocation4], %s721
          %s723 = sand.u32 %s196, 1
          %s724 = smul.addr %s723, 8
          %s725 = scalar_lea.vmem [#allocation8], %s724
          %726 = dma.done %s722, 128
        $region76: #{tpu_custom_call.1} parent=71 // pred_fallthru
          _
        // Predicated region
        $region77: #{tpu_custom_call.1} parent=71 // pred_check
          %p727 = pneg %p239
        $region78: #{tpu_custom_call.1} parent=71 // pred_check_branch
          %729 = sbr.rel (%p727) target = $region80
        $region79: #{tpu_custom_call.1} parent=71 // pred_region
          %s730 = sand.u32 %s224, 1
          %s731 = scalar_lea.sflag [#allocation10], %s730
          %s732 = sand.u32 %s224, 1
          %s733 = smul.addr %s732, 8
          %s734 = scalar_lea.vmem [#allocation9], %s733
          %735 = dma.done %s731, 128
        $region80: #{tpu_custom_call.1} parent=71 // pred_fallthru
          _
      $region72: #{tpu_custom_call.1} parent=5 // pred_fallthru
        _
    $region6: #{tpu_custom_call.1} parent=1 // loop_footer
      %s29 = sadd.s32 1, %s25
    $region7: #{tpu_custom_call.1} parent=1 // loop_footer_branch
      %24 = sbr.rel target = $region3
    $region8: #{tpu_custom_call.1} parent=1 // loop_exit
      _
    %736 = vsyncpa [#allocation3], 1
    %s737 = scalar_lea.sflag [#allocation3], 1
    %738 = vsyncpa %s737, 1
    %739 = vsyncpa [#allocation6], 1
    %s740 = scalar_lea.sflag [#allocation6], 1
    %741 = vsyncpa %s740, 1
    %742 = vsyncpa [#allocation4], 1
    %s743 = scalar_lea.sflag [#allocation4], 1
    %744 = vsyncpa %s743, 1
    %745 = vsyncpa [#allocation10], 1
    %s746 = scalar_lea.sflag [#allocation10], 1
    %747 = vsyncpa %s746, 1

</llo_original>
